<compile_context>
chip_gen: v7x
topology: tpu7x:2x2x1
jax: 0.10.0
libtpu: 0.0.40
codegen_flags: <defaults>
</compile_context>

<pallas_src>
import functools

import numpy as np

import jax
import jax.numpy as jnp
from jax.experimental import pallas as pl
from jax.experimental.pallas import tpu as pltpu


def _round_up(x, m):
    return ((x + m - 1) // m) * m


@functools.lru_cache(maxsize=None)
def _vmem_limit_bytes():
    """Per-generation scoped-VMEM limit with ~25% headroom (v7x: ~48 MiB of 64)."""
    try:
        cap = int(pltpu.get_tpu_info().vmem_capacity_bytes)
        return int(min(cap * 3 // 4, 100 * 1024 * 1024))
    except Exception:
        return 48 * 1024 * 1024


def _pick_tile(total, requested, *, min_grid=4, floor=512):
    """Largest tile <= requested that (a) doesn't over-pad tiny problems and (b) keeps at
    least `min_grid` grid steps on large problems so the 'parallel' grid axis can be
    split across v7x's two TensorCores."""
    cap = _round_up(max(total, 1), 8)
    t = min(requested, cap)
    split = _round_up(pl.cdiv(max(total, 1), min_grid), 8)
    t = min(t, max(split, min(floor, cap)))
    return max(t, 8)


# ----------------------------- Pallas kernels ------------------------------ #

def _node_proj_kernel(x_ref, scale_ref, shift_ref, w_ref, b_ref, p_ref):
    """Per-node: x_bn = x*scale + shift (folded BN affine);
    p = x_bn @ [W1a-W1b | W1b] + [b1 | 0]  (single merged dot, bf16 store)."""
    x = x_ref[...] * scale_ref[...] + shift_ref[...]
    p = jnp.dot(x, w_ref[...], preferred_element_type=jnp.float32) + b_ref[...]
    p_ref[...] = p.astype(p_ref.dtype)


def _edge_mlp_kernel(s_ref, w2_ref, b2_ref, w3_ref, b3_ref, o_ref, *, final_relu):
    """Per-edge MLP. Layer-1 pre-activation (with b1) is precomputed per node and gathered
    /added outside, so layer 1 here is just ReLU. bf16 streams, f32 accumulation, natural
    narrow (tile_e, out_dim) output."""
    h = jnp.maximum(s_ref[...], 0)                                       # layer 1 ReLU
    h = jnp.dot(h, w2_ref[...], preferred_element_type=jnp.float32) + b2_ref[...]
    h = jnp.maximum(h, 0.0)                                              # layer 2 ReLU
    h = jnp.dot(h.astype(w3_ref.dtype), w3_ref[...],
                preferred_element_type=jnp.float32) + b3_ref[...]
    if final_relu:
        h = jnp.maximum(h, 0.0)
    o_ref[...] = h.astype(o_ref.dtype)


# ------------------------------- Wrappers ---------------------------------- #

def node_projection(x, scale, shift, w_cat, b_cat, *, tile_n, out_dtype):
    n, d = x.shape
    wide = w_cat.shape[1]
    tile = _pick_tile(n, tile_n)
    n_pad = _round_up(n, tile)
    if n_pad != n:
        x = jnp.pad(x, ((0, n_pad - n), (0, 0)))
    out_isize = np.dtype(out_dtype).itemsize
    cost = pl.CostEstimate(
        flops=2 * n_pad * d * wide,
        transcendentals=0,
        bytes_accessed=int(n_pad * d * 4 + 2 * d * 4 + d * wide * 4 + wide * 4
                           + n_pad * wide * out_isize))
    p = pl.pallas_call(
        _node_proj_kernel,
        out_shape=jax.ShapeDtypeStruct((n_pad, wide), out_dtype),
        grid_spec=pltpu.PrefetchScalarGridSpec(
            num_scalar_prefetch=0,
            grid=(n_pad // tile,),
            in_specs=[pl.BlockSpec((tile, d), lambda i: (i, 0)),
                      pl.BlockSpec((1, d),    lambda i: (0, 0)),
                      pl.BlockSpec((1, d),    lambda i: (0, 0)),
                      pl.BlockSpec((d, wide), lambda i: (0, 0)),
                      pl.BlockSpec((1, wide), lambda i: (0, 0))],
            out_specs=pl.BlockSpec((tile, wide), lambda i: (i, 0))),
        compiler_params=pltpu.CompilerParams(
            dimension_semantics=("parallel",),
            vmem_limit_bytes=_vmem_limit_bytes()),
        cost_estimate=cost,
    )(x, scale, shift, w_cat, b_cat)
    return p[:n]


def edge_mlp(s_e, w2, b2, w3, b3, *, final_relu, tile_e):
    e, big = s_e.shape
    out_dim = w3.shape[1]
    tile = _pick_tile(e, tile_e)
    e_pad = _round_up(e, tile)
    if e_pad != e:
        s_e = jnp.pad(s_e, ((0, e_pad - e), (0, 0)))
    kernel = functools.partial(_edge_mlp_kernel, final_relu=final_relu)
    cost = pl.CostEstimate(
        flops=2 * e_pad * (big * big + big * out_dim),
        transcendentals=0,
        bytes_accessed=int(e_pad * big * s_e.dtype.itemsize
                           + big * big * w2.dtype.itemsize + big * 4
                           + big * out_dim * w3.dtype.itemsize + out_dim * 4
                           + e_pad * out_dim * 4))
    msg = pl.pallas_call(
        kernel,
        out_shape=jax.ShapeDtypeStruct((e_pad, out_dim), jnp.float32),
        grid_spec=pltpu.PrefetchScalarGridSpec(
            num_scalar_prefetch=0,
            grid=(e_pad // tile,),
            in_specs=[pl.BlockSpec((tile, big),     lambda i: (i, 0)),
                      pl.BlockSpec((big, big),      lambda i: (0, 0)),
                      pl.BlockSpec((1, big),        lambda i: (0, 0)),
                      pl.BlockSpec((big, out_dim),  lambda i: (0, 0)),
                      pl.BlockSpec((1, out_dim),    lambda i: (0, 0))],
            out_specs=pl.BlockSpec((tile, out_dim), lambda i: (i, 0))),
        compiler_params=pltpu.CompilerParams(
            dimension_semantics=("parallel",),
            vmem_limit_bytes=_vmem_limit_bytes()),
        cost_estimate=cost,
    )(s_e, w2, b2, w3, b3)
    # Keep this slice: padded edge rows carry bias-derived garbage and must not reach
    # the aggregation.
    return msg[:e]


def edge_conv(x, src, dst, inv_counts, mlp_params, *, final_relu,
              scale=None, shift=None, tile_e=8192, tile_n=4096,
              compute_dtype=jnp.bfloat16):
    """PyG-style EdgeConv with mean aggregation. Optional scale/shift folds a preceding
    per-feature affine (BatchNorm) into the layer-1 node projection."""
    n, d = x.shape
    w1, b1, w2, b2, w3, b3 = mlp_params
    big = w1.shape[1]

    # Algebraic split of layer 1: cat([x_i, x_j - x_i]) @ W1 = x_i @ (W1a - W1b) + x_j @ W1b.
    wa = w1[:d] - w1[d:]
    wb = w1[d:]

    if scale is None:
        scale = jnp.ones((1, d), jnp.float32)
        shift = jnp.zeros((1, d), jnp.float32)

    # Zero-pad the tiny feature dim to a multiple of 8 (zero cols / zero weight rows are inert).
    d_pad = _round_up(d, 8)
    if d_pad != d:
        x = jnp.pad(x, ((0, 0), (0, d_pad - d)))
        wa = jnp.pad(wa, ((0, d_pad - d), (0, 0)))
        wb = jnp.pad(wb, ((0, d_pad - d), (0, 0)))
        scale = jnp.pad(scale, ((0, 0), (0, d_pad - d)))
        shift = jnp.pad(shift, ((0, 0), (0, d_pad - d)))

    # Single merged (d_pad, 2*big) projection; b1 folded into the target half so per-edge
    # layer 1 downstream is a pure add + ReLU.
    w_cat = jnp.concatenate([wa, wb], axis=1)
    b_cat = jnp.concatenate([b1, jnp.zeros_like(b1)], axis=1)

    p = node_projection(x.astype(jnp.float32), scale, shift, w_cat, b_cat,
                        tile_n=tile_n, out_dtype=compute_dtype)
    pa = p[:, :big]          # x_i projection (+ b1), bf16
    pb = p[:, big:]          # x_j projection, bf16

    # TODO(synk): data-dependent per-edge gather kept as a single fused XLA gather+add;
    # an in-kernel gather would need VMEM-resident projections + per-tile index blocks.
    s_e = jnp.take(pa, dst, axis=0) + jnp.take(pb, src, axis=0)

    msg = edge_mlp(s_e,
                   w2.astype(compute_dtype), b2,
                   w3.astype(compute_dtype), b3,
                   final_relu=final_relu, tile_e=tile_e)

    # TODO(synk): scatter-mean kept as XLA segment_sum; a Pallas ragged reduce would need
    # dst-sorted edges + scalar-prefetched segment offsets.
    summed = jax.ops.segment_sum(msg, dst, num_segments=n)
    return summed * inv_counts


def edge_net_forward(x, edge_index, params, *, tile_e=8192, tile_n=4096,
                     compute_dtype=jnp.bfloat16):
    n = x.shape[0]
    src = edge_index[0]      # x_j (source)
    dst = edge_index[1]      # x_i (aggregation target)
    e = src.shape[0]

    # Mean-aggregation metadata depends only on dst: compute once, share across both layers.
    counts = jax.ops.segment_sum(jnp.ones((e,), jnp.float32), dst, num_segments=n)
    inv_counts = (1.0 / jnp.maximum(counts, 1.0))[:, None]

    # BatchNorm1d (training mode: biased batch stats, eps=1e-5) folded into the encoder's
    # node-projection kernel as a per-feature scale/shift.
    mean = jnp.mean(x, axis=0, keepdims=True)
    var = jnp.mean((x - mean) ** 2, axis=0, keepdims=True)
    scale = params["bn_gamma"] * jax.lax.rsqrt(var + 1e-5)
    shift = params["bn_beta"] - mean * scale

    h = edge_conv(x, src, dst, inv_counts, params["encoder"], final_relu=True,
                  scale=scale, shift=shift, tile_e=tile_e, tile_n=tile_n,
                  compute_dtype=compute_dtype)
    return edge_conv(h, src, dst, inv_counts, params["decoder"], final_relu=False,
                     tile_e=tile_e, tile_n=tile_n, compute_dtype=compute_dtype)


# ---------------------------- Parameter setup ------------------------------ #

def _linear_init(key, fan_in, fan_out):
    kw, kb = jax.random.split(key)
    bound = 1.0 / jnp.sqrt(jnp.float32(fan_in))
    w = jax.random.uniform(kw, (fan_in, fan_out), jnp.float32, -bound, bound)
    b = jax.random.uniform(kb, (1, fan_out), jnp.float32, -bound, bound)
    return w, b


def init_params(key, input_dim=4, big_dim=32, hidden_dim=2):
    keys = jax.random.split(key, 6)
    ew1, eb1 = _linear_init(keys[0], 2 * input_dim, big_dim)
    ew2, eb2 = _linear_init(keys[1], big_dim, big_dim)
    ew3, eb3 = _linear_init(keys[2], big_dim, hidden_dim)
    dw1, db1 = _linear_init(keys[3], 2 * hidden_dim, big_dim)
    dw2, db2 = _linear_init(keys[4], big_dim, big_dim)
    dw3, db3 = _linear_init(keys[5], big_dim, input_dim)
    return {
        "bn_gamma": jnp.ones((1, input_dim), jnp.float32),
        "bn_beta": jnp.zeros((1, input_dim), jnp.float32),
        "encoder": (ew1, eb1, ew2, eb2, ew3, eb3),
        "decoder": (dw1, db1, dw2, db2, dw3, db3),
    }


# --------------------------------- Main ------------------------------------ #

if __name__ == "__main__":
    key = jax.random.PRNGKey(0)
    kx, ke, kp = jax.random.split(key, 3)

    N, E = 8, 16
    input_dim, big_dim, hidden_dim = 4, 32, 2

    x = jax.random.normal(kx, (N, input_dim), jnp.float32)
    edge_index = jax.random.randint(ke, (2, E), 0, N, dtype=jnp.int32)
    params = init_params(kp, input_dim, big_dim, hidden_dim)

    fwd = jax.jit(edge_net_forward)
    out = fwd(x, edge_index, params)
    jax.block_until_ready(out)
    assert out.shape == (N, input_dim)
    print("KERNEL_OK")
</pallas_src>

<mosaic_0001>
module attributes {stable_mosaic.version = 11 : i64} {
  func.func private @main(%arg0: i32) attributes {dimension_semantics = [#tpu.dimension_semantics<core_parallel>], iteration_bounds = array<i64: 2>, tpu.core_type = #tpu.core_type<sc_scalar_subcore>, window_params = []} {
    return
  }
}

module attributes {stable_mosaic.version = 11 : i64} {
  func.func private @main(%arg0: i32) attributes {dimension_semantics = [#tpu.dimension_semantics<core_parallel>], iteration_bounds = array<i64: 2>, tpu.core_type = #tpu.core_type<sc_scalar_subcore>, window_params = []} {
    return
  }
}

module attributes {stable_mosaic.version = 11 : i64} {
  func.func @_node_proj_kernel(%arg0: i32, %arg1: memref<8x8xf32, #tpu.memory_space<vmem>>, %arg2: memref<1x8xf32, #tpu.memory_space<vmem>>, %arg3: memref<1x8xf32, #tpu.memory_space<vmem>>, %arg4: memref<8x64xf32, #tpu.memory_space<vmem>>, %arg5: memref<1x64xf32, #tpu.memory_space<vmem>>, %arg6: memref<8x64xbf16, #tpu.memory_space<vmem>>) attributes {dimension_semantics = [#tpu.dimension_semantics<parallel>], iteration_bounds = array<i64: 1>, scalar_prefetch = 0 : i64, scratch_operands = 0 : i64, tpu.core_type = #tpu.core_type<tc>, window_params = [{transform_indices = @transform_0, window_bounds = array<i64: 8, 8>}, {pipeline_mode = #tpu.pipeline_mode<synchronous>, transform_indices = @transform_1, window_bounds = array<i64: 1, 8>}, {pipeline_mode = #tpu.pipeline_mode<synchronous>, transform_indices = @transform_2, window_bounds = array<i64: 1, 8>}, {pipeline_mode = #tpu.pipeline_mode<synchronous>, transform_indices = @transform_3, window_bounds = array<i64: 8, 64>}, {pipeline_mode = #tpu.pipeline_mode<synchronous>, transform_indices = @transform_4, window_bounds = array<i64: 1, 64>}, {transform_indices = @transform_5, window_bounds = array<i64: 8, 64>}]} {
    %c0 = arith.constant 0 : index
    %c0_0 = arith.constant 0 : index
    %0 = vector.load %arg1[%c0, %c0_0] : memref<8x8xf32, #tpu.memory_space<vmem>>, vector<8x8xf32>
    %c0_1 = arith.constant 0 : index
    %c0_2 = arith.constant 0 : index
    %1 = vector.load %arg2[%c0_1, %c0_2] : memref<1x8xf32, #tpu.memory_space<vmem>>, vector<1x8xf32>
    %2 = vector.broadcast %1 : vector<1x8xf32> to vector<8x8xf32>
    %3 = arith.mulf %0, %2 : vector<8x8xf32>
    %c0_3 = arith.constant 0 : index
    %c0_4 = arith.constant 0 : index
    %4 = vector.load %arg3[%c0_3, %c0_4] : memref<1x8xf32, #tpu.memory_space<vmem>>, vector<1x8xf32>
    %5 = vector.broadcast %4 : vector<1x8xf32> to vector<8x8xf32>
    %6 = arith.addf %3, %5 : vector<8x8xf32>
    %c0_5 = arith.constant 0 : index
    %c0_6 = arith.constant 0 : index
    %7 = vector.load %arg4[%c0_5, %c0_6] : memref<8x64xf32, #tpu.memory_space<vmem>>, vector<8x64xf32>
    %cst = arith.constant dense<0.000000e+00> : vector<8x64xf32>
    %8 = tpu.matmul %6, %7, %cst {dimension_numbers = #tpu.dot_dimension_numbers<[1], [0], [0], [1], [0, 0, 1, 1], [], []>} : vector<8x8xf32>, vector<8x64xf32>, vector<8x64xf32> -> vector<8x64xf32>
    %c0_7 = arith.constant 0 : index
    %c0_8 = arith.constant 0 : index
    %9 = vector.load %arg5[%c0_7, %c0_8] : memref<1x64xf32, #tpu.memory_space<vmem>>, vector<1x64xf32>
    %10 = vector.broadcast %9 : vector<1x64xf32> to vector<8x64xf32>
    %11 = arith.addf %8, %10 : vector<8x64xf32>
    %12 = arith.truncf %11 : vector<8x64xf32> to vector<8x64xbf16>
    %c0_9 = arith.constant 0 : index
    %c0_10 = arith.constant 0 : index
    %13 = vector.load %arg6[%c0_9, %c0_10] : memref<8x64xbf16, #tpu.memory_space<vmem>>, vector<8x64xbf16>
    tpu.vector_store %arg6[%c0_9, %c0_10], %12 {strides = array<i32>} : memref<8x64xbf16, #tpu.memory_space<vmem>>, vector<8x64xbf16>,
    return
  }
  func.func @transform_0(%arg0: i32) -> (i32, i32) {
    %c0_i32 = arith.constant 0 : i32
    %c0_i32_0 = arith.constant 0 : i32
    return %arg0, %c0_i32 : i32, i32
  }
  func.func @transform_1(%arg0: i32) -> (i32, i32) {
    %c0_i32 = arith.constant 0 : i32
    %c0_i32_0 = arith.constant 0 : i32
    %c0_i32_1 = arith.constant 0 : i32
    return %c0_i32, %c0_i32_0 : i32, i32
  }
  func.func @transform_2(%arg0: i32) -> (i32, i32) {
    %c0_i32 = arith.constant 0 : i32
    %c0_i32_0 = arith.constant 0 : i32
    %c0_i32_1 = arith.constant 0 : i32
    return %c0_i32, %c0_i32_0 : i32, i32
  }
  func.func @transform_3(%arg0: i32) -> (i32, i32) {
    %c0_i32 = arith.constant 0 : i32
    %c0_i32_0 = arith.constant 0 : i32
    %c0_i32_1 = arith.constant 0 : i32
    return %c0_i32, %c0_i32_0 : i32, i32
  }
  func.func @transform_4(%arg0: i32) -> (i32, i32) {
    %c0_i32 = arith.constant 0 : i32
    %c0_i32_0 = arith.constant 0 : i32
    %c0_i32_1 = arith.constant 0 : i32
    return %c0_i32, %c0_i32_0 : i32, i32
  }
  func.func @transform_5(%arg0: i32) -> (i32, i32) {
    %c0_i32 = arith.constant 0 : i32
    %c0_i32_0 = arith.constant 0 : i32
    return %arg0, %c0_i32 : i32, i32
  }
}

module attributes {stable_mosaic.version = 11 : i64} {
  func.func @_edge_mlp_kernel(%arg0: i32, %arg1: memref<16x32xbf16, #tpu.memory_space<vmem>>, %arg2: memref<32x32xbf16, #tpu.memory_space<vmem>>, %arg3: memref<1x32xf32, #tpu.memory_space<vmem>>, %arg4: memref<32x2xbf16, #tpu.memory_space<vmem>>, %arg5: memref<1x2xf32, #tpu.memory_space<vmem>>, %arg6: memref<16x2xf32, #tpu.memory_space<vmem>>) attributes {dimension_semantics = [#tpu.dimension_semantics<parallel>], iteration_bounds = array<i64: 1>, scalar_prefetch = 0 : i64, scratch_operands = 0 : i64, tpu.core_type = #tpu.core_type<tc>, window_params = [{transform_indices = @transform_0, window_bounds = array<i64: 16, 32>}, {pipeline_mode = #tpu.pipeline_mode<synchronous>, transform_indices = @transform_1, window_bounds = array<i64: 32, 32>}, {pipeline_mode = #tpu.pipeline_mode<synchronous>, transform_indices = @transform_2, window_bounds = array<i64: 1, 32>}, {pipeline_mode = #tpu.pipeline_mode<synchronous>, transform_indices = @transform_3, window_bounds = array<i64: 32, 2>}, {pipeline_mode = #tpu.pipeline_mode<synchronous>, transform_indices = @transform_4, window_bounds = array<i64: 1, 2>}, {transform_indices = @transform_5, window_bounds = array<i64: 16, 2>}]} {
    %c0 = arith.constant 0 : index
    %c0_0 = arith.constant 0 : index
    %0 = vector.load %arg1[%c0, %c0_0] : memref<16x32xbf16, #tpu.memory_space<vmem>>, vector<16x32xbf16>
    %cst = arith.constant 0.000000e+00 : bf16
    %1 = vector.broadcast %cst : bf16 to vector<16x32xbf16>
    %2 = arith.maximumf %0, %1 : vector<16x32xbf16>
    %c0_1 = arith.constant 0 : index
    %c0_2 = arith.constant 0 : index
    %3 = vector.load %arg2[%c0_1, %c0_2] : memref<32x32xbf16, #tpu.memory_space<vmem>>, vector<32x32xbf16>
    %cst_3 = arith.constant dense<0.000000e+00> : vector<16x32xf32>
    %4 = tpu.matmul %2, %3, %cst_3 {dimension_numbers = #tpu.dot_dimension_numbers<[1], [0], [0], [1], [0, 0, 1, 1], [], []>} : vector<16x32xbf16>, vector<32x32xbf16>, vector<16x32xf32> -> vector<16x32xf32>
    %c0_4 = arith.constant 0 : index
    %c0_5 = arith.constant 0 : index
    %5 = vector.load %arg3[%c0_4, %c0_5] : memref<1x32xf32, #tpu.memory_space<vmem>>, vector<1x32xf32>
    %6 = vector.broadcast %5 : vector<1x32xf32> to vector<16x32xf32>
    %7 = arith.addf %4, %6 : vector<16x32xf32>
    %cst_6 = arith.constant 0.000000e+00 : f32
    %8 = vector.broadcast %cst_6 : f32 to vector<16x32xf32>
    %9 = arith.maximumf %7, %8 : vector<16x32xf32>
    %10 = arith.truncf %9 : vector<16x32xf32> to vector<16x32xbf16>
    %c0_7 = arith.constant 0 : index
    %c0_8 = arith.constant 0 : index
    %11 = vector.load %arg4[%c0_7, %c0_8] : memref<32x2xbf16, #tpu.memory_space<vmem>>, vector<32x2xbf16>
    %cst_9 = arith.constant dense<0.000000e+00> : vector<16x2xf32>
    %12 = tpu.matmul %10, %11, %cst_9 {dimension_numbers = #tpu.dot_dimension_numbers<[1], [0], [0], [1], [0, 0, 1, 1], [], []>} : vector<16x32xbf16>, vector<32x2xbf16>, vector<16x2xf32> -> vector<16x2xf32>
    %c0_10 = arith.constant 0 : index
    %c0_11 = arith.constant 0 : index
    %13 = vector.load %arg5[%c0_10, %c0_11] : memref<1x2xf32, #tpu.memory_space<vmem>>, vector<1x2xf32>
    %14 = vector.broadcast %13 : vector<1x2xf32> to vector<16x2xf32>
    %15 = arith.addf %12, %14 : vector<16x2xf32>
    %cst_12 = arith.constant 0.000000e+00 : f32
    %16 = vector.broadcast %cst_12 : f32 to vector<16x2xf32>
    %17 = arith.maximumf %15, %16 : vector<16x2xf32>
    %c0_13 = arith.constant 0 : index
    %c0_14 = arith.constant 0 : index
    %18 = vector.load %arg6[%c0_13, %c0_14] : memref<16x2xf32, #tpu.memory_space<vmem>>, vector<16x2xf32>
    tpu.vector_store %arg6[%c0_13, %c0_14], %17 {strides = array<i32>} : memref<16x2xf32, #tpu.memory_space<vmem>>, vector<16x2xf32>,
    return
  }
  func.func @transform_0(%arg0: i32) -> (i32, i32) {
    %c0_i32 = arith.constant 0 : i32
    %c0_i32_0 = arith.constant 0 : i32
    return %arg0, %c0_i32 : i32, i32
  }
  func.func @transform_1(%arg0: i32) -> (i32, i32) {
    %c0_i32 = arith.constant 0 : i32
    %c0_i32_0 = arith.constant 0 : i32
    %c0_i32_1 = arith.constant 0 : i32
    return %c0_i32, %c0_i32_0 : i32, i32
  }
  func.func @transform_2(%arg0: i32) -> (i32, i32) {
    %c0_i32 = arith.constant 0 : i32
    %c0_i32_0 = arith.constant 0 : i32
    %c0_i32_1 = arith.constant 0 : i32
    return %c0_i32, %c0_i32_0 : i32, i32
  }
  func.func @transform_3(%arg0: i32) -> (i32, i32) {
    %c0_i32 = arith.constant 0 : i32
    %c0_i32_0 = arith.constant 0 : i32
    %c0_i32_1 = arith.constant 0 : i32
    return %c0_i32, %c0_i32_0 : i32, i32
  }
  func.func @transform_4(%arg0: i32) -> (i32, i32) {
    %c0_i32 = arith.constant 0 : i32
    %c0_i32_0 = arith.constant 0 : i32
    %c0_i32_1 = arith.constant 0 : i32
    return %c0_i32, %c0_i32_0 : i32, i32
  }
  func.func @transform_5(%arg0: i32) -> (i32, i32) {
    %c0_i32 = arith.constant 0 : i32
    %c0_i32_0 = arith.constant 0 : i32
    return %arg0, %c0_i32 : i32, i32
  }
}

module attributes {stable_mosaic.version = 11 : i64} {
  func.func @_edge_mlp_kernel(%arg0: i32, %arg1: memref<16x32xbf16, #tpu.memory_space<vmem>>, %arg2: memref<32x32xbf16, #tpu.memory_space<vmem>>, %arg3: memref<1x32xf32, #tpu.memory_space<vmem>>, %arg4: memref<32x4xbf16, #tpu.memory_space<vmem>>, %arg5: memref<1x4xf32, #tpu.memory_space<vmem>>, %arg6: memref<16x4xf32, #tpu.memory_space<vmem>>) attributes {dimension_semantics = [#tpu.dimension_semantics<parallel>], iteration_bounds = array<i64: 1>, scalar_prefetch = 0 : i64, scratch_operands = 0 : i64, tpu.core_type = #tpu.core_type<tc>, window_params = [{transform_indices = @transform_0, window_bounds = array<i64: 16, 32>}, {pipeline_mode = #tpu.pipeline_mode<synchronous>, transform_indices = @transform_1, window_bounds = array<i64: 32, 32>}, {pipeline_mode = #tpu.pipeline_mode<synchronous>, transform_indices = @transform_2, window_bounds = array<i64: 1, 32>}, {pipeline_mode = #tpu.pipeline_mode<synchronous>, transform_indices = @transform_3, window_bounds = array<i64: 32, 4>}, {pipeline_mode = #tpu.pipeline_mode<synchronous>, transform_indices = @transform_4, window_bounds = array<i64: 1, 4>}, {transform_indices = @transform_5, window_bounds = array<i64: 16, 4>}]} {
    %c0 = arith.constant 0 : index
    %c0_0 = arith.constant 0 : index
    %0 = vector.load %arg1[%c0, %c0_0] : memref<16x32xbf16, #tpu.memory_space<vmem>>, vector<16x32xbf16>
    %cst = arith.constant 0.000000e+00 : bf16
    %1 = vector.broadcast %cst : bf16 to vector<16x32xbf16>
    %2 = arith.maximumf %0, %1 : vector<16x32xbf16>
    %c0_1 = arith.constant 0 : index
    %c0_2 = arith.constant 0 : index
    %3 = vector.load %arg2[%c0_1, %c0_2] : memref<32x32xbf16, #tpu.memory_space<vmem>>, vector<32x32xbf16>
    %cst_3 = arith.constant dense<0.000000e+00> : vector<16x32xf32>
    %4 = tpu.matmul %2, %3, %cst_3 {dimension_numbers = #tpu.dot_dimension_numbers<[1], [0], [0], [1], [0, 0, 1, 1], [], []>} : vector<16x32xbf16>, vector<32x32xbf16>, vector<16x32xf32> -> vector<16x32xf32>
    %c0_4 = arith.constant 0 : index
    %c0_5 = arith.constant 0 : index
    %5 = vector.load %arg3[%c0_4, %c0_5] : memref<1x32xf32, #tpu.memory_space<vmem>>, vector<1x32xf32>
    %6 = vector.broadcast %5 : vector<1x32xf32> to vector<16x32xf32>
    %7 = arith.addf %4, %6 : vector<16x32xf32>
    %cst_6 = arith.constant 0.000000e+00 : f32
    %8 = vector.broadcast %cst_6 : f32 to vector<16x32xf32>
    %9 = arith.maximumf %7, %8 : vector<16x32xf32>
    %10 = arith.truncf %9 : vector<16x32xf32> to vector<16x32xbf16>
    %c0_7 = arith.constant 0 : index
    %c0_8 = arith.constant 0 : index
    %11 = vector.load %arg4[%c0_7, %c0_8] : memref<32x4xbf16, #tpu.memory_space<vmem>>, vector<32x4xbf16>
    %cst_9 = arith.constant dense<0.000000e+00> : vector<16x4xf32>
    %12 = tpu.matmul %10, %11, %cst_9 {dimension_numbers = #tpu.dot_dimension_numbers<[1], [0], [0], [1], [0, 0, 1, 1], [], []>} : vector<16x32xbf16>, vector<32x4xbf16>, vector<16x4xf32> -> vector<16x4xf32>
    %c0_10 = arith.constant 0 : index
    %c0_11 = arith.constant 0 : index
    %13 = vector.load %arg5[%c0_10, %c0_11] : memref<1x4xf32, #tpu.memory_space<vmem>>, vector<1x4xf32>
    %14 = vector.broadcast %13 : vector<1x4xf32> to vector<16x4xf32>
    %15 = arith.addf %12, %14 : vector<16x4xf32>
    %c0_12 = arith.constant 0 : index
    %c0_13 = arith.constant 0 : index
    %16 = vector.load %arg6[%c0_12, %c0_13] : memref<16x4xf32, #tpu.memory_space<vmem>>, vector<16x4xf32>
    tpu.vector_store %arg6[%c0_12, %c0_13], %15 {strides = array<i32>} : memref<16x4xf32, #tpu.memory_space<vmem>>, vector<16x4xf32>,
    return
  }
  func.func @transform_0(%arg0: i32) -> (i32, i32) {
    %c0_i32 = arith.constant 0 : i32
    %c0_i32_0 = arith.constant 0 : i32
    return %arg0, %c0_i32 : i32, i32
  }
  func.func @transform_1(%arg0: i32) -> (i32, i32) {
    %c0_i32 = arith.constant 0 : i32
    %c0_i32_0 = arith.constant 0 : i32
    %c0_i32_1 = arith.constant 0 : i32
    return %c0_i32, %c0_i32_0 : i32, i32
  }
  func.func @transform_2(%arg0: i32) -> (i32, i32) {
    %c0_i32 = arith.constant 0 : i32
    %c0_i32_0 = arith.constant 0 : i32
    %c0_i32_1 = arith.constant 0 : i32
    return %c0_i32, %c0_i32_0 : i32, i32
  }
  func.func @transform_3(%arg0: i32) -> (i32, i32) {
    %c0_i32 = arith.constant 0 : i32
    %c0_i32_0 = arith.constant 0 : i32
    %c0_i32_1 = arith.constant 0 : i32
    return %c0_i32, %c0_i32_0 : i32, i32
  }
  func.func @transform_4(%arg0: i32) -> (i32, i32) {
    %c0_i32 = arith.constant 0 : i32
    %c0_i32_0 = arith.constant 0 : i32
    %c0_i32_1 = arith.constant 0 : i32
    return %c0_i32, %c0_i32_0 : i32, i32
  }
  func.func @transform_5(%arg0: i32) -> (i32, i32) {
    %c0_i32 = arith.constant 0 : i32
    %c0_i32_0 = arith.constant 0 : i32
    return %arg0, %c0_i32 : i32, i32
  }
}

</mosaic_0001>

<llo_original>
// kernel: edge_net_forward.4
$region0: #{edge_net_forward.4}
  #allocation0 [shape = 'u32[]', space=smem, size = 0x4, offset = 0x4, fixed_abs, tag = 'smem constant byte address 0x4 - core index']
  #allocation1 [shape = 'u32[144,128]{1,0:T(1,128)}', space=vmem, size = 0x12000, scoped, tag = 'internal scratch']
  %s0 = inlined_call_operand.vmem [shape: f32[8,8], index: 0, kind: input, shape index: {}]
  %s1 = inlined_call_operand.vmem [shape: f32[1,8], index: 1, kind: input, shape index: {}]
  %s2 = inlined_call_operand.vmem [shape: f32[1,8], index: 2, kind: input, shape index: {}]
  %s3 = inlined_call_operand.vmem [shape: f32[8,64], index: 3, kind: input, shape index: {}]
  %s4 = inlined_call_operand.vmem [shape: f32[1,64], index: 4, kind: input, shape index: {}]
  %s5 = inlined_call_operand.vmem [shape: bf16[8,64], index: 5, kind: output, shape index: {}]
  %s6 = sld [smem:[#allocation0]]
  $region30: #{edge_net_forward.4} parent=0
    _
  %s8 = ssub.s32 1, %s6
  %s9 = scalar_select 0, %s8, %s6
  // Predicated region
  $region2: #{edge_net_forward.4} parent=0 // pred_check
    _
  $region3: #{edge_net_forward.4} parent=0 // pred_check_branch
    %11 = sbr.rel (0) target = $region5
  $region4: #{edge_net_forward.4} parent=0 // pred_region
    _
  $region5: #{edge_net_forward.4} parent=0 // pred_fallthru
    _
  // Predicated region
  $region6: #{edge_net_forward.4} parent=0 // pred_check
    _
  $region7: #{edge_net_forward.4} parent=0 // pred_check_branch
    %13 = sbr.rel (0) target = $region9
  $region8: #{edge_net_forward.4} parent=0 // pred_region
    _
  $region9: #{edge_net_forward.4} parent=0 // pred_fallthru
    _
  // Predicated region
  $region10: #{edge_net_forward.4} parent=0 // pred_check
    _
  $region11: #{edge_net_forward.4} parent=0 // pred_check_branch
    %15 = sbr.rel (0) target = $region13
  $region12: #{edge_net_forward.4} parent=0 // pred_region
    _
  $region13: #{edge_net_forward.4} parent=0 // pred_fallthru
    _
  // Predicated region
  $region14: #{edge_net_forward.4} parent=0 // pred_check
    _
  $region15: #{edge_net_forward.4} parent=0 // pred_check_branch
    %17 = sbr.rel (0) target = $region17
  $region16: #{edge_net_forward.4} parent=0 // pred_region
    _
  $region17: #{edge_net_forward.4} parent=0 // pred_fallthru
    _
  // Predicated region
  $region18: #{edge_net_forward.4} parent=0 // pred_check
    _
  $region19: #{edge_net_forward.4} parent=0 // pred_check_branch
    %19 = sbr.rel (0) target = $region21
  $region20: #{edge_net_forward.4} parent=0 // pred_region
    _
  $region21: #{edge_net_forward.4} parent=0 // pred_fallthru
    _
  %v20 = vld [vmem:[%s0] sm:$0xff]
  %v21 = vld [vmem:[%s1] sm:$0x1]
  %v23 = vlaneseq
  %v24 = vshrl.u32 %v23, 7
  %v25 = vsub.s32 0, %v24
  %v26 = vrot.slane %v21, %v25
  %v28 = vmul.f32 %v20, %v26
  %v29 = vld [vmem:[%s2] sm:$0x1]
  %v31 = vlaneseq
  %v32 = vshrl.u32 %v31, 7
  %v33 = vsub.s32 0, %v32
  %v34 = vrot.slane %v29, %v33
  %v36 = vadd.f32 %v28, %v34
  %v37 = vld [vmem:[%s3] sm:$0xff]
  %v38 = vld [vmem:[%s4] sm:$0x1]
  %v40 = vlaneseq
  %v41 = vshrl.u32 %v40, 7
  %v42 = vsub.s32 0, %v41
  %v43 = vrot.slane %v38, %v42
  %vm45 = vcmask 64512
  %v47 = vsel %vm45, %v36, 0
  %49 = vmatprep.subr.mxu0 0.0
  %50 = vmatpush1.msra.mxu0 %v37
  %51 = vmatprep.subr.mxu0 0.0
  %52 = vmatpush1.msra.mxu0 0.0
  %53 = vmatprep.subr.mxu0 0.0
  %54 = vmatpush1.msra.mxu0 0.0
  %55 = vmatprep.subr.mxu0 0.0
  %56 = vmatpush1.msra.mxu0 0.0
  %57 = vmatprep.subr.mxu0 0.0
  %58 = vmatpush1.msra.mxu0 0.0
  %59 = vmatprep.subr.mxu0 0.0
  %60 = vmatpush1.msra.mxu0 0.0
  %61 = vmatprep.subr.mxu0 0.0
  %62 = vmatpush1.msra.mxu0 0.0
  %63 = vmatprep.subr.mxu0 0.0
  %64 = vmatpush1.msra.mxu0 0.0
  %65 = vmatprep.subr.mxu0 0.0
  %66 = vmatpush1.msra.mxu0 0.0
  %67 = vmatprep.subr.mxu0 0.0
  %68 = vmatpush1.msra.mxu0 0.0
  %69 = vmatprep.subr.mxu0 0.0
  %70 = vmatpush1.msra.mxu0 0.0
  %71 = vmatprep.subr.mxu0 0.0
  %72 = vmatpush1.msra.mxu0 0.0
  %73 = vmatprep.subr.mxu0 0.0
  %74 = vmatpush1.msra.mxu0 0.0
  %75 = vmatprep.subr.mxu0 0.0
  %76 = vmatpush1.msra.mxu0 0.0
  %77 = vmatprep.subr.mxu0 0.0
  %78 = vmatpush1.msra.mxu0 0.0
  %79 = vmatprep.subr.mxu0 0.0
  %80 = vmatpush1.msra.mxu0 0.0
  %81 = vmatprep.subr.mxu0 0.0
  %82 = vmatpush1.msra.mxu0 0.0
  %83 = vmatprep.subr.mxu0 0.0
  %84 = vmatpush1.msra.mxu0 0.0
  %85 = vmatprep.subr.mxu0 0.0
  %86 = vmatpush1.msra.mxu0 0.0
  %87 = vmatprep.subr.mxu0 0.0
  %88 = vmatpush1.msra.mxu0 0.0
  %89 = vmatprep.subr.mxu0 0.0
  %90 = vmatpush1.msra.mxu0 0.0
  %91 = vmatprep.subr.mxu0 0.0
  %92 = vmatpush1.msra.mxu0 0.0
  %93 = vmatprep.subr.mxu0 0.0
  %94 = vmatpush1.msra.mxu0 0.0
  %95 = vmatprep.subr.mxu0 0.0
  %96 = vmatpush1.msra.mxu0 0.0
  %97 = vmatprep.subr.mxu0 0.0
  %98 = vmatpush1.msra.mxu0 0.0
  %99 = vmatprep.subr.mxu0 0.0
  %100 = vmatpush1.msra.mxu0 0.0
  %101 = vmatprep.subr.mxu0 0.0
  %102 = vmatpush1.msra.mxu0 0.0
  %103 = vmatprep.subr.mxu0 0.0
  %104 = vmatpush1.msra.mxu0 0.0
  %105 = vmatprep.subr.mxu0 0.0
  %106 = vmatpush1.msra.mxu0 0.0
  %107 = vmatprep.subr.mxu0 0.0
  %108 = vmatpush1.msra.mxu0 0.0
  %109 = vmatprep.subr.mxu0 0.0
  %110 = vmatpush1.msra.mxu0 0.0
  %111 = vmatprep.subr.mxu0 0.0
  %112 = vmatpush1.msra.mxu0 0.0
  %113 = vmatprep.mubr.f32.mxu0 0.0
  %114 = vmatmul.mubr.f32.gmra.mrb[0].mxu0 %v47
  %v115 = vpop.f32.mrb[0].mxu0
  %v116 = vadd.f32 %v43, %v115
  %v117 = vpop.f32.mrb[0].mxu0
  %118 = vdwg.mxu0
  %v119 = vpack.c.bf16 %v116, %v116
  %vm120 = vcmask 519168
  %121 = vst.msk [vmem:[%s5] sm:$0xf] %vm120, %v119
  // Predicated region
  $region22: #{edge_net_forward.4} parent=0 // pred_check
    _
  $region23: #{edge_net_forward.4} parent=0 // pred_check_branch
    %123 = sbr.rel (0) target = $region25
  $region24: #{edge_net_forward.4} parent=0 // pred_region
    _
  $region25: #{edge_net_forward.4} parent=0 // pred_fallthru
    _
  // Predicated region
  $region26: #{edge_net_forward.4} parent=0 // pred_check
    _
  $region27: #{edge_net_forward.4} parent=0 // pred_check_branch
    %125 = sbr.rel (0) target = $region29
  $region28: #{edge_net_forward.4} parent=0 // pred_region
    _
  $region29: #{edge_net_forward.4} parent=0 // pred_fallthru
    _

// kernel: edge_net_forward.5
$region0: #{edge_net_forward.5}
  #allocation0 [shape = 'u32[]', space=smem, size = 0x4, offset = 0x4, fixed_abs, tag = 'smem constant byte address 0x4 - core index']
  #allocation1 [shape = 'u32[144,128]{1,0:T(1,128)}', space=vmem, size = 0x12000, scoped, tag = 'internal scratch']
  %s0 = inlined_call_operand.vmem [shape: bf16[16,32], index: 0, kind: input, shape index: {}]
  %s1 = inlined_call_operand.vmem [shape: bf16[32,32], index: 1, kind: input, shape index: {}]
  %s2 = inlined_call_operand.vmem [shape: f32[1,32], index: 2, kind: input, shape index: {}]
  %s3 = inlined_call_operand.vmem [shape: bf16[32,2], index: 3, kind: input, shape index: {}]
  %s4 = inlined_call_operand.vmem [shape: f32[1,2], index: 4, kind: input, shape index: {}]
  %s5 = inlined_call_operand.vmem [shape: f32[16,2], index: 5, kind: output, shape index: {}]
  %s6 = sld [smem:[#allocation0]]
  $region30: #{edge_net_forward.5} parent=0
    _
  %s8 = ssub.s32 1, %s6
  %s9 = scalar_select 0, %s8, %s6
  // Predicated region
  $region2: #{edge_net_forward.5} parent=0 // pred_check
    _
  $region3: #{edge_net_forward.5} parent=0 // pred_check_branch
    %11 = sbr.rel (0) target = $region5
  $region4: #{edge_net_forward.5} parent=0 // pred_region
    _
  $region5: #{edge_net_forward.5} parent=0 // pred_fallthru
    _
  // Predicated region
  $region6: #{edge_net_forward.5} parent=0 // pred_check
    _
  $region7: #{edge_net_forward.5} parent=0 // pred_check_branch
    %13 = sbr.rel (0) target = $region9
  $region8: #{edge_net_forward.5} parent=0 // pred_region
    _
  $region9: #{edge_net_forward.5} parent=0 // pred_fallthru
    _
  // Predicated region
  $region10: #{edge_net_forward.5} parent=0 // pred_check
    _
  $region11: #{edge_net_forward.5} parent=0 // pred_check_branch
    %15 = sbr.rel (0) target = $region13
  $region12: #{edge_net_forward.5} parent=0 // pred_region
    _
  $region13: #{edge_net_forward.5} parent=0 // pred_fallthru
    _
  // Predicated region
  $region14: #{edge_net_forward.5} parent=0 // pred_check
    _
  $region15: #{edge_net_forward.5} parent=0 // pred_check_branch
    %17 = sbr.rel (0) target = $region17
  $region16: #{edge_net_forward.5} parent=0 // pred_region
    _
  $region17: #{edge_net_forward.5} parent=0 // pred_fallthru
    _
  // Predicated region
  $region18: #{edge_net_forward.5} parent=0 // pred_check
    _
  $region19: #{edge_net_forward.5} parent=0 // pred_check_branch
    %19 = sbr.rel (0) target = $region21
  $region20: #{edge_net_forward.5} parent=0 // pred_region
    _
  $region21: #{edge_net_forward.5} parent=0 // pred_fallthru
    _
  %v21 = vld [vmem:[%s0] sm:$0xf]
  %v22 = vld [vmem:[%s0 + $0x4] sm:$0xf]
  %v23 = vmax.bf16 %v21, 0
  %v24 = vmax.bf16 %v22, 0
  %v25 = vld [vmem:[%s1] sm:$0xf]
  %v26 = vld [vmem:[%s1 + $0x4] sm:$0xf]
  %v27 = vld [vmem:[%s1 + $0x8] sm:$0xf]
  %v28 = vld [vmem:[%s1 + $0xc] sm:$0xf]
  %v29 = vld [vmem:[%s2] sm:$0x1]
  %v31 = vlaneseq
  %v32 = vshrl.u32 %v31, 7
  %v33 = vsub.s32 0, %v32
  %v34 = vrot.slane %v29, %v33
  %v38 = vunpack.c.l.b16 %v23
  %v39 = vunpack.c.l.b16 %v24
  %v40 = vpack.c.b16 %v39, %v38
  %v45 = vunpack.c.l.b16 %v25
  %v46 = vunpack.c.l.b16 %v26
  %v47 = vunpack.c.l.b16 %v27
  %v48 = vunpack.c.l.b16 %v28
  %v49 = vpack.c.b16 %v46, %v45
  %v50 = vpack.c.b16 %v48, %v47
  %vm53 = vcmask 261120
  %v55 = vsel %vm53, %v40, 0
  %57 = vmatprep.subr.bf16.mxu0 0
  %58 = vmatpush1.bf16.msra.mxu0 %v49
  %59 = vmatprep.subr.bf16.mxu0 0
  %60 = vmatpush1.bf16.msra.mxu0 %v50
  %61 = vmatprep.subr.bf16.mxu0 0
  %62 = vmatpush1.bf16.msra.mxu0 0
  %63 = vmatprep.subr.bf16.mxu0 0
  %64 = vmatpush1.bf16.msra.mxu0 0
  %65 = vmatprep.subr.bf16.mxu0 0
  %66 = vmatpush1.bf16.msra.mxu0 0
  %67 = vmatprep.subr.bf16.mxu0 0
  %68 = vmatpush1.bf16.msra.mxu0 0
  %69 = vmatprep.subr.bf16.mxu0 0
  %70 = vmatpush1.bf16.msra.mxu0 0
  %71 = vmatprep.subr.bf16.mxu0 0
  %72 = vmatpush1.bf16.msra.mxu0 0
  %73 = vmatprep.subr.bf16.mxu0 0
  %74 = vmatpush1.bf16.msra.mxu0 0
  %75 = vmatprep.subr.bf16.mxu0 0
  %76 = vmatpush1.bf16.msra.mxu0 0
  %77 = vmatprep.subr.bf16.mxu0 0
  %78 = vmatpush1.bf16.msra.mxu0 0
  %79 = vmatprep.subr.bf16.mxu0 0
  %80 = vmatpush1.bf16.msra.mxu0 0
  %81 = vmatprep.subr.bf16.mxu0 0
  %82 = vmatpush1.bf16.msra.mxu0 0
  %83 = vmatprep.subr.bf16.mxu0 0
  %84 = vmatpush1.bf16.msra.mxu0 0
  %85 = vmatprep.subr.bf16.mxu0 0
  %86 = vmatpush1.bf16.msra.mxu0 0
  %87 = vmatprep.subr.bf16.mxu0 0
  %88 = vmatpush1.bf16.msra.mxu0 0
  %89 = vmatprep.mubr.bf16.mxu0 0
  %90 = vmatmul.mubr.bf16.gmra.mrb[0].mxu0 %v55
  %v91 = vpop.f32.mrb[0].mxu0
  %v92 = vadd.f32 %v34, %v91
  %v93 = vpop.f32.mrb[0].mxu0
  %v94 = vpop.f32.mrb[0].mxu0
  %v95 = vadd.f32 %v34, %v94
  %v96 = vpop.f32.mrb[0].mxu0
  %97 = vdwg.mxu0
  %v98 = vmax.f32 %v92, 0.0
  %v99 = vmax.f32 %v95, 0.0
  %v100 = vpack.c.bf16 %v99, %v98
  %v101 = vld [vmem:[%s3] sm:$0xf]
  %v102 = vld [vmem:[%s3 + $0x4] sm:$0xf]
  %v103 = vld [vmem:[%s3 + $0x8] sm:$0xf]
  %v104 = vld [vmem:[%s3 + $0xc] sm:$0xf]
  %v105 = vld [vmem:[%s4] sm:$0x1]
  %v107 = vlaneseq
  %v108 = vshrl.u32 %v107, 7
  %v109 = vsub.s32 0, %v108
  %v110 = vrot.slane %v105, %v109
  %v116 = vunpack.c.l.b16 %v101
  %v117 = vunpack.c.l.b16 %v102
  %v118 = vunpack.c.l.b16 %v103
  %v119 = vunpack.c.l.b16 %v104
  %v120 = vpack.c.b16 %v117, %v116
  %v121 = vpack.c.b16 %v119, %v118
  %v125 = vsel %vm53, %v100, 0
  %127 = vmatprep.subr.bf16.mxu0 0
  %128 = vmatpush1.bf16.msra.mxu0 %v120
  %129 = vmatprep.subr.bf16.mxu0 0
  %130 = vmatpush1.bf16.msra.mxu0 %v121
  %131 = vmatprep.subr.bf16.mxu0 0
  %132 = vmatpush1.bf16.msra.mxu0 0
  %133 = vmatprep.subr.bf16.mxu0 0
  %134 = vmatpush1.bf16.msra.mxu0 0
  %135 = vmatprep.subr.bf16.mxu0 0
  %136 = vmatpush1.bf16.msra.mxu0 0
  %137 = vmatprep.subr.bf16.mxu0 0
  %138 = vmatpush1.bf16.msra.mxu0 0
  %139 = vmatprep.subr.bf16.mxu0 0
  %140 = vmatpush1.bf16.msra.mxu0 0
  %141 = vmatprep.subr.bf16.mxu0 0
  %142 = vmatpush1.bf16.msra.mxu0 0
  %143 = vmatprep.subr.bf16.mxu0 0
  %144 = vmatpush1.bf16.msra.mxu0 0
  %145 = vmatprep.subr.bf16.mxu0 0
  %146 = vmatpush1.bf16.msra.mxu0 0
  %147 = vmatprep.subr.bf16.mxu0 0
  %148 = vmatpush1.bf16.msra.mxu0 0
  %149 = vmatprep.subr.bf16.mxu0 0
  %150 = vmatpush1.bf16.msra.mxu0 0
  %151 = vmatprep.subr.bf16.mxu0 0
  %152 = vmatpush1.bf16.msra.mxu0 0
  %153 = vmatprep.subr.bf16.mxu0 0
  %154 = vmatpush1.bf16.msra.mxu0 0
  %155 = vmatprep.subr.bf16.mxu0 0
  %156 = vmatpush1.bf16.msra.mxu0 0
  %157 = vmatprep.subr.bf16.mxu0 0
  %158 = vmatpush1.bf16.msra.mxu0 0
  %159 = vmatprep.mubr.bf16.mxu0 0
  %160 = vmatmul.mubr.bf16.gmra.mrb[0].mxu0 %v125
  %v161 = vpop.f32.mrb[0].mxu0
  %v162 = vadd.f32 %v110, %v161
  %v163 = vpop.f32.mrb[0].mxu0
  %v164 = vpop.f32.mrb[0].mxu0
  %v165 = vadd.f32 %v110, %v164
  %v166 = vpop.f32.mrb[0].mxu0
  %167 = vdwg.mxu0
  %v168 = vmax.f32 %v162, 0.0
  %v169 = vmax.f32 %v165, 0.0
  %vm170 = vcmask 15360
  %171 = vst.msk [vmem:[%s5] sm:$0xff] %vm170, %v168
  %172 = vst.msk [vmem:[%s5 + $0x8] sm:$0xff] %vm170, %v169
  // Predicated region
  $region22: #{edge_net_forward.5} parent=0 // pred_check
    _
  $region23: #{edge_net_forward.5} parent=0 // pred_check_branch
    %174 = sbr.rel (0) target = $region25
  $region24: #{edge_net_forward.5} parent=0 // pred_region
    _
  $region25: #{edge_net_forward.5} parent=0 // pred_fallthru
    _
  // Predicated region
  $region26: #{edge_net_forward.5} parent=0 // pred_check
    _
  $region27: #{edge_net_forward.5} parent=0 // pred_check_branch
    %176 = sbr.rel (0) target = $region29
  $region28: #{edge_net_forward.5} parent=0 // pred_region
    _
  $region29: #{edge_net_forward.5} parent=0 // pred_fallthru
    _

// kernel: edge_net_forward.7
$region0: #{edge_net_forward.7}
  #allocation0 [shape = 'u32[]', space=smem, size = 0x4, offset = 0x4, fixed_abs, tag = 'smem constant byte address 0x4 - core index']
  #allocation1 [shape = 'u32[144,128]{1,0:T(1,128)}', space=vmem, size = 0x12000, scoped, tag = 'internal scratch']
  %s0 = inlined_call_operand.vmem [shape: bf16[16,32], index: 0, kind: input, shape index: {}]
  %s1 = inlined_call_operand.vmem [shape: bf16[32,32], index: 1, kind: input, shape index: {}]
  %s2 = inlined_call_operand.vmem [shape: f32[1,32], index: 2, kind: input, shape index: {}]
  %s3 = inlined_call_operand.vmem [shape: bf16[32,4], index: 3, kind: input, shape index: {}]
  %s4 = inlined_call_operand.vmem [shape: f32[1,4], index: 4, kind: input, shape index: {}]
  %s5 = inlined_call_operand.vmem [shape: f32[16,4], index: 5, kind: output, shape index: {}]
  %s6 = sld [smem:[#allocation0]]
  $region30: #{edge_net_forward.7} parent=0
    _
  %s8 = ssub.s32 1, %s6
  %s9 = scalar_select 0, %s8, %s6
  // Predicated region
  $region2: #{edge_net_forward.7} parent=0 // pred_check
    _
  $region3: #{edge_net_forward.7} parent=0 // pred_check_branch
    %11 = sbr.rel (0) target = $region5
  $region4: #{edge_net_forward.7} parent=0 // pred_region
    _
  $region5: #{edge_net_forward.7} parent=0 // pred_fallthru
    _
  // Predicated region
  $region6: #{edge_net_forward.7} parent=0 // pred_check
    _
  $region7: #{edge_net_forward.7} parent=0 // pred_check_branch
    %13 = sbr.rel (0) target = $region9
  $region8: #{edge_net_forward.7} parent=0 // pred_region
    _
  $region9: #{edge_net_forward.7} parent=0 // pred_fallthru
    _
  // Predicated region
  $region10: #{edge_net_forward.7} parent=0 // pred_check
    _
  $region11: #{edge_net_forward.7} parent=0 // pred_check_branch
    %15 = sbr.rel (0) target = $region13
  $region12: #{edge_net_forward.7} parent=0 // pred_region
    _
  $region13: #{edge_net_forward.7} parent=0 // pred_fallthru
    _
  // Predicated region
  $region14: #{edge_net_forward.7} parent=0 // pred_check
    _
  $region15: #{edge_net_forward.7} parent=0 // pred_check_branch
    %17 = sbr.rel (0) target = $region17
  $region16: #{edge_net_forward.7} parent=0 // pred_region
    _
  $region17: #{edge_net_forward.7} parent=0 // pred_fallthru
    _
  // Predicated region
  $region18: #{edge_net_forward.7} parent=0 // pred_check
    _
  $region19: #{edge_net_forward.7} parent=0 // pred_check_branch
    %19 = sbr.rel (0) target = $region21
  $region20: #{edge_net_forward.7} parent=0 // pred_region
    _
  $region21: #{edge_net_forward.7} parent=0 // pred_fallthru
    _
  %v21 = vld [vmem:[%s0] sm:$0xf]
  %v22 = vld [vmem:[%s0 + $0x4] sm:$0xf]
  %v23 = vmax.bf16 %v21, 0
  %v24 = vmax.bf16 %v22, 0
  %v25 = vld [vmem:[%s1] sm:$0xf]
  %v26 = vld [vmem:[%s1 + $0x4] sm:$0xf]
  %v27 = vld [vmem:[%s1 + $0x8] sm:$0xf]
  %v28 = vld [vmem:[%s1 + $0xc] sm:$0xf]
  %v29 = vld [vmem:[%s2] sm:$0x1]
  %v31 = vlaneseq
  %v32 = vshrl.u32 %v31, 7
  %v33 = vsub.s32 0, %v32
  %v34 = vrot.slane %v29, %v33
  %v38 = vunpack.c.l.b16 %v23
  %v39 = vunpack.c.l.b16 %v24
  %v40 = vpack.c.b16 %v39, %v38
  %v45 = vunpack.c.l.b16 %v25
  %v46 = vunpack.c.l.b16 %v26
  %v47 = vunpack.c.l.b16 %v27
  %v48 = vunpack.c.l.b16 %v28
  %v49 = vpack.c.b16 %v46, %v45
  %v50 = vpack.c.b16 %v48, %v47
  %vm53 = vcmask 261120
  %v55 = vsel %vm53, %v40, 0
  %57 = vmatprep.subr.bf16.mxu0 0
  %58 = vmatpush1.bf16.msra.mxu0 %v49
  %59 = vmatprep.subr.bf16.mxu0 0
  %60 = vmatpush1.bf16.msra.mxu0 %v50
  %61 = vmatprep.subr.bf16.mxu0 0
  %62 = vmatpush1.bf16.msra.mxu0 0
  %63 = vmatprep.subr.bf16.mxu0 0
  %64 = vmatpush1.bf16.msra.mxu0 0
  %65 = vmatprep.subr.bf16.mxu0 0
  %66 = vmatpush1.bf16.msra.mxu0 0
  %67 = vmatprep.subr.bf16.mxu0 0
  %68 = vmatpush1.bf16.msra.mxu0 0
  %69 = vmatprep.subr.bf16.mxu0 0
  %70 = vmatpush1.bf16.msra.mxu0 0
  %71 = vmatprep.subr.bf16.mxu0 0
  %72 = vmatpush1.bf16.msra.mxu0 0
  %73 = vmatprep.subr.bf16.mxu0 0
  %74 = vmatpush1.bf16.msra.mxu0 0
  %75 = vmatprep.subr.bf16.mxu0 0
  %76 = vmatpush1.bf16.msra.mxu0 0
  %77 = vmatprep.subr.bf16.mxu0 0
  %78 = vmatpush1.bf16.msra.mxu0 0
  %79 = vmatprep.subr.bf16.mxu0 0
  %80 = vmatpush1.bf16.msra.mxu0 0
  %81 = vmatprep.subr.bf16.mxu0 0
  %82 = vmatpush1.bf16.msra.mxu0 0
  %83 = vmatprep.subr.bf16.mxu0 0
  %84 = vmatpush1.bf16.msra.mxu0 0
  %85 = vmatprep.subr.bf16.mxu0 0
  %86 = vmatpush1.bf16.msra.mxu0 0
  %87 = vmatprep.subr.bf16.mxu0 0
  %88 = vmatpush1.bf16.msra.mxu0 0
  %89 = vmatprep.mubr.bf16.mxu0 0
  %90 = vmatmul.mubr.bf16.gmra.mrb[0].mxu0 %v55
  %v91 = vpop.f32.mrb[0].mxu0
  %v92 = vadd.f32 %v34, %v91
  %v93 = vpop.f32.mrb[0].mxu0
  %v94 = vpop.f32.mrb[0].mxu0
  %v95 = vadd.f32 %v34, %v94
  %v96 = vpop.f32.mrb[0].mxu0
  %97 = vdwg.mxu0
  %v98 = vmax.f32 %v92, 0.0
  %v99 = vmax.f32 %v95, 0.0
  %v100 = vpack.c.bf16 %v99, %v98
  %v101 = vld [vmem:[%s3] sm:$0xf]
  %v102 = vld [vmem:[%s3 + $0x4] sm:$0xf]
  %v103 = vld [vmem:[%s3 + $0x8] sm:$0xf]
  %v104 = vld [vmem:[%s3 + $0xc] sm:$0xf]
  %v105 = vld [vmem:[%s4] sm:$0x1]
  %v107 = vlaneseq
  %v108 = vshrl.u32 %v107, 7
  %v109 = vsub.s32 0, %v108
  %v110 = vrot.slane %v105, %v109
  %v116 = vunpack.c.l.b16 %v101
  %v117 = vunpack.c.l.b16 %v102
  %v118 = vunpack.c.l.b16 %v103
  %v119 = vunpack.c.l.b16 %v104
  %v120 = vpack.c.b16 %v117, %v116
  %v121 = vpack.c.b16 %v119, %v118
  %v125 = vsel %vm53, %v100, 0
  %127 = vmatprep.subr.bf16.mxu0 0
  %128 = vmatpush1.bf16.msra.mxu0 %v120
  %129 = vmatprep.subr.bf16.mxu0 0
  %130 = vmatpush1.bf16.msra.mxu0 %v121
  %131 = vmatprep.subr.bf16.mxu0 0
  %132 = vmatpush1.bf16.msra.mxu0 0
  %133 = vmatprep.subr.bf16.mxu0 0
  %134 = vmatpush1.bf16.msra.mxu0 0
  %135 = vmatprep.subr.bf16.mxu0 0
  %136 = vmatpush1.bf16.msra.mxu0 0
  %137 = vmatprep.subr.bf16.mxu0 0
  %138 = vmatpush1.bf16.msra.mxu0 0
  %139 = vmatprep.subr.bf16.mxu0 0
  %140 = vmatpush1.bf16.msra.mxu0 0
  %141 = vmatprep.subr.bf16.mxu0 0
  %142 = vmatpush1.bf16.msra.mxu0 0
  %143 = vmatprep.subr.bf16.mxu0 0
  %144 = vmatpush1.bf16.msra.mxu0 0
  %145 = vmatprep.subr.bf16.mxu0 0
  %146 = vmatpush1.bf16.msra.mxu0 0
  %147 = vmatprep.subr.bf16.mxu0 0
  %148 = vmatpush1.bf16.msra.mxu0 0
  %149 = vmatprep.subr.bf16.mxu0 0
  %150 = vmatpush1.bf16.msra.mxu0 0
  %151 = vmatprep.subr.bf16.mxu0 0
  %152 = vmatpush1.bf16.msra.mxu0 0
  %153 = vmatprep.subr.bf16.mxu0 0
  %154 = vmatpush1.bf16.msra.mxu0 0
  %155 = vmatprep.subr.bf16.mxu0 0
  %156 = vmatpush1.bf16.msra.mxu0 0
  %157 = vmatprep.subr.bf16.mxu0 0
  %158 = vmatpush1.bf16.msra.mxu0 0
  %159 = vmatprep.mubr.bf16.mxu0 0
  %160 = vmatmul.mubr.bf16.gmra.mrb[0].mxu0 %v125
  %v161 = vpop.f32.mrb[0].mxu0
  %v162 = vadd.f32 %v110, %v161
  %v163 = vpop.f32.mrb[0].mxu0
  %v164 = vpop.f32.mrb[0].mxu0
  %v165 = vadd.f32 %v110, %v164
  %v166 = vpop.f32.mrb[0].mxu0
  %167 = vdwg.mxu0
  %vm168 = vcmask 31744
  %169 = vst.msk [vmem:[%s5] sm:$0xff] %vm168, %v162
  %170 = vst.msk [vmem:[%s5 + $0x8] sm:$0xff] %vm168, %v165
  // Predicated region
  $region22: #{edge_net_forward.7} parent=0 // pred_check
    _
  $region23: #{edge_net_forward.7} parent=0 // pred_check_branch
    %172 = sbr.rel (0) target = $region25
  $region24: #{edge_net_forward.7} parent=0 // pred_region
    _
  $region25: #{edge_net_forward.7} parent=0 // pred_fallthru
    _
  // Predicated region
  $region26: #{edge_net_forward.7} parent=0 // pred_check
    _
  $region27: #{edge_net_forward.7} parent=0 // pred_check_branch
    %174 = sbr.rel (0) target = $region29
  $region28: #{edge_net_forward.7} parent=0 // pred_region
    _
  $region29: #{edge_net_forward.7} parent=0 // pred_fallthru
    _

</llo_original>
